<compile_context>
chip_gen: v6e
topology: v6e:2x2x1
jax: 0.10.0
libtpu: 0.0.40
codegen_flags: <defaults>
</compile_context>

<pallas_src>
import functools

import jax
import jax.numpy as jnp
from jax.experimental import pallas as pl
from jax.experimental.pallas import tpu as pltpu


def _temporal_block_kernel(x_ref, w1_ref, b1_ref, w2_ref, b2_ref, *rest,
                           pad, K, dilation, has_downsample):
    # x_ref : (b_tile, C_in, L)       channels-first, UNPADDED
    # w1_ref: (C_out, K*C_in)         im2col weights (weight-normed), row = j*C_in + c
    # w2_ref: (C_out, K*C_out)
    # b*_ref: (C_out, 1)
    # wd_ref: (C_out, C_in), bd_ref: (C_out, 1)   [only if has_downsample]
    # out   : (b_tile, C_out, L)
    if has_downsample:
        wd_ref, bd_ref, out_ref = rest
    else:
        (out_ref,) = rest

    b_tile, c_in, L = x_ref.shape
    c_out = out_ref.shape[1]
    Lx = L + pad                        # extended conv1 width; first `pad` cols are fake
    cdt = x_ref.dtype

    x = x_ref[...]                                                  # (b, C_in, L)

    # In-kernel causal zero left-padding of x by 2*pad (no wrapper HBM pad pass).
    if pad > 0:
        xp = jnp.concatenate(
            [jnp.zeros((b_tile, c_in, 2 * pad), cdt), x], axis=2)   # (b, C_in, L+2*pad)
    else:
        xp = x

    # ---- conv1: im2col over taps -> ONE batched matmul ----
    if K > 1:
        cols1 = jnp.concatenate(
            [xp[:, :, j * dilation:j * dilation + Lx] for j in range(K)],
            axis=1)                                                 # (b, K*C_in, Lx)
    else:
        cols1 = xp[:, :, :Lx]
    w1_b = jnp.broadcast_to(w1_ref[...], (b_tile, c_out, K * c_in))
    h1 = jnp.einsum('bok,bkl->bol', w1_b, cols1,
                    preferred_element_type=jnp.float32)             # (b, C_out, Lx) f32
    h1 = jnp.maximum(h1 + b1_ref[...].astype(jnp.float32), 0.0)
    # dropout1: identity (eval-mode semantics)

    # First `pad` columns are "negative time": zero them so conv2 sees exactly the
    # zero left-padding the PyTorch module applies (chomp trick) -- all in-register.
    if pad > 0:
        col = jax.lax.broadcasted_iota(jnp.int32, (b_tile, c_out, Lx), 2)
        h1 = jnp.where(col >= pad, h1, 0.0)
    h1 = h1.astype(w2_ref.dtype)

    # ---- conv2: im2col over taps -> ONE batched matmul ----
    if K > 1:
        cols2 = jnp.concatenate(
            [h1[:, :, j * dilation:j * dilation + L] for j in range(K)],
            axis=1)                                                 # (b, K*C_out, L)
    else:
        cols2 = h1[:, :, :L]
    w2_b = jnp.broadcast_to(w2_ref[...], (b_tile, c_out, K * c_out))
    h2 = jnp.einsum('bok,bkl->bol', w2_b, cols2,
                    preferred_element_type=jnp.float32)             # (b, C_out, L) f32
    h2 = jnp.maximum(h2 + b2_ref[...].astype(jnp.float32), 0.0)
    # dropout2: identity (eval-mode semantics)

    # ---- residual + final ReLU ----
    if has_downsample:
        wd_b = jnp.broadcast_to(wd_ref[...], (b_tile, c_out, c_in))
        res = (jnp.einsum('boc,bcl->bol', wd_b, x,
                          preferred_element_type=jnp.float32)
               + bd_ref[...].astype(jnp.float32))
    else:
        res = x.astype(jnp.float32)

    out_ref[...] = jnp.maximum(h2 + res, 0.0).astype(out_ref.dtype)


def _weight_norm(v, g):
    # PyTorch weight_norm(dim=0): w = g * v / ||v||, norm over dims (1, 2)
    norm = jnp.sqrt(jnp.sum(v * v, axis=(1, 2), keepdims=True))
    return g * v / norm


def _vmem_capacity_bytes():
    try:
        return int(pltpu.get_tpu_info().vmem_capacity_bytes)
    except Exception:
        return 64 << 20                           # conservative (v7x per-TC) fallback


def _pick_b_tile(n, per_elem_bytes, budget_bytes):
    """Largest divisor of n that fits the VMEM budget while keeping >= 2 grid
    steps when n >= 2 (both v7x TensorCores busy + pipeline overlap)."""
    best = 1
    for d in range(1, n + 1):
        if n % d:
            continue
        if n >= 2 and n // d < 2:
            continue
        if d * per_elem_bytes > budget_bytes:
            continue
        best = d
    return best


def temporal_block_forward(x, params, *, kernel_size, dilation, padding=None,
                           compute_dtype=None):
    """x: (N, C_in, L) (PyTorch NCL). Returns (N, C_out, L).

    compute_dtype: optional low-precision dtype (e.g. jnp.bfloat16 on v6e/v7x)
    for activations/weights; accumulation is always float32.
    """
    N, C_in, L = x.shape
    K = kernel_size
    pad = (K - 1) * dilation
    if padding is not None:
        assert padding == pad, "causal TCN assumes padding == (kernel_size-1)*dilation"
    out_dtype = x.dtype

    # effective (weight-normed) conv weights -- glue, plain JAX (tiny tensors)
    w1 = _weight_norm(params["v1"], params["g1"])          # (C_out, C_in, K)
    w2 = _weight_norm(params["v2"], params["g2"])          # (C_out, C_out, K)
    C_out = w1.shape[0]
    has_downsample = (C_in != C_out)

    cdt = jnp.dtype(compute_dtype) if compute_dtype is not None else x.dtype
    x = x.astype(cdt)

    # im2col weight layout: row index (j, c) flattened as j*C + c
    w1_f = jnp.transpose(w1, (0, 2, 1)).reshape(C_out, K * C_in).astype(cdt)
    w2_f = jnp.transpose(w2, (0, 2, 1)).reshape(C_out, K * C_out).astype(cdt)
    b1 = params["b1"].reshape(C_out, 1).astype(jnp.float32)
    b2 = params["b2"].reshape(C_out, 1).astype(jnp.float32)

    # ---- generation-aware VMEM budgeting ----
    vmem_cap = _vmem_capacity_bytes()
    itemsize = jnp.dtype(cdt).itemsize
    Lx, Lp = L + pad, L + 2 * pad
    per_elem = (2 * (C_in * L + C_out * L) * itemsize                 # dbl-buffered I/O
                + (C_in * Lp + K * C_in * Lx + K * C_out * L) * itemsize
                + (2 * C_out * Lx + 3 * C_out * L) * 4)               # f32 intermediates
    b_tile = _pick_b_tile(N, per_elem, vmem_cap // 4)
    grid = (N // b_tile,)

    in_specs = [
        pl.BlockSpec((b_tile, C_in, L), lambda i: (i, 0, 0)),
        pl.BlockSpec((C_out, K * C_in), lambda i: (0, 0)),
        pl.BlockSpec((C_out, 1), lambda i: (0, 0)),
        pl.BlockSpec((C_out, K * C_out), lambda i: (0, 0)),
        pl.BlockSpec((C_out, 1), lambda i: (0, 0)),
    ]
    args = [x, w1_f, b1, w2_f, b2]
    flops = 2 * N * L * (K * C_in * C_out + K * C_out * C_out)
    bytes_accessed = ((N * C_in * L + N * C_out * L) * itemsize
                      + (w1_f.size + w2_f.size) * itemsize + (b1.size + b2.size) * 4)
    if has_downsample:
        wd = params["wd"][:, :, 0].astype(cdt)             # (C_out, C_in)
        bd = params["bd"].reshape(C_out, 1).astype(jnp.float32)
        in_specs += [pl.BlockSpec((C_out, C_in), lambda i: (0, 0)),
                     pl.BlockSpec((C_out, 1), lambda i: (0, 0))]
        args += [wd, bd]
        flops += 2 * N * L * C_in * C_out
        bytes_accessed += wd.size * itemsize + bd.size * 4

    kernel = functools.partial(
        _temporal_block_kernel, pad=pad, K=K, dilation=dilation,
        has_downsample=has_downsample)

    out = pl.pallas_call(
        kernel,
        out_shape=jax.ShapeDtypeStruct((N, C_out, L), out_dtype),
        grid_spec=pltpu.PrefetchScalarGridSpec(
            num_scalar_prefetch=0,
            grid=grid,
            in_specs=in_specs,
            out_specs=pl.BlockSpec((b_tile, C_out, L), lambda i: (i, 0, 0)),
        ),
        compiler_params=pltpu.CompilerParams(
            dimension_semantics=("parallel",),
            vmem_limit_bytes=(vmem_cap * 3) // 4),
        cost_estimate=pl.CostEstimate(flops=int(flops), transcendentals=0,
                                      bytes_accessed=int(bytes_accessed)),
    )(*args)
    return out


def _reference(x, params, *, kernel_size, dilation):
    """Pure-JAX reference (lax.conv) for correctness checking."""
    K = kernel_size
    pad = (K - 1) * dilation
    dn = ("NCH", "OIH", "NCH")
    w1 = _weight_norm(params["v1"], params["g1"])
    w2 = _weight_norm(params["v2"], params["g2"])

    y = jax.lax.conv_general_dilated(x, w1, (1,), [(pad, pad)],
                                     rhs_dilation=(dilation,),
                                     dimension_numbers=dn)
    y = jnp.maximum(y[:, :, :-pad] + params["b1"][None, :, None], 0.0)
    y = jax.lax.conv_general_dilated(y, w2, (1,), [(pad, pad)],
                                     rhs_dilation=(dilation,),
                                     dimension_numbers=dn)
    y = jnp.maximum(y[:, :, :-pad] + params["b2"][None, :, None], 0.0)

    if x.shape[1] != w1.shape[0]:
        res = jax.lax.conv_general_dilated(x, params["wd"], (1,), [(0, 0)],
                                           dimension_numbers=dn)
        res = res + params["bd"][None, :, None]
    else:
        res = x
    return jnp.maximum(y + res, 0.0)


if __name__ == "__main__":
    key = jax.random.PRNGKey(0)

    def make_params(k, c_in, c_out, ks):
        sub = jax.random.split(k, 8)
        p = {
            "v1": 0.01 * jax.random.normal(sub[0], (c_out, c_in, ks), jnp.float32),
            "g1": 0.5 + jax.random.uniform(sub[1], (c_out, 1, 1), jnp.float32),
            "b1": 0.1 * jax.random.normal(sub[2], (c_out,), jnp.float32),
            "v2": 0.01 * jax.random.normal(sub[3], (c_out, c_out, ks), jnp.float32),
            "g2": 0.5 + jax.random.uniform(sub[4], (c_out, 1, 1), jnp.float32),
            "b2": 0.1 * jax.random.normal(sub[5], (c_out,), jnp.float32),
        }
        if c_in != c_out:
            p["wd"] = 0.01 * jax.random.normal(sub[6], (c_out, c_in, 1), jnp.float32)
            p["bd"] = 0.1 * jax.random.normal(sub[7], (c_out,), jnp.float32)
        return p

    # Case 1: TemporalBlock(n_inputs=4, n_outputs=8, kernel_size=3, stride=1,
    #                       dilation=2, padding=4, dropout=0.2) -- 1x1 downsample path.
    N, C_in, C_out, L = 2, 4, 8, 16
    K, dil = 3, 2
    k1, k2, k3 = jax.random.split(key, 3)
    params = make_params(k1, C_in, C_out, K)
    x = jax.random.normal(k2, (N, C_in, L), jnp.float32)

    out = jax.block_until_ready(
        temporal_block_forward(x, params, kernel_size=K, dilation=dil, padding=4))
    ref = _reference(x, params, kernel_size=K, dilation=dil)
    assert out.shape == (N, C_out, L)
    assert jnp.allclose(out, ref, rtol=1e-4, atol=1e-4), "mismatch (downsample path)"

    # Case 2: identity-residual path (C_in == C_out, downsample weights omitted).
    params2 = make_params(k3, C_out, C_out, K)
    x2 = jax.random.normal(k2, (N, C_out, L), jnp.float32)
    out2 = jax.block_until_ready(
        temporal_block_forward(x2, params2, kernel_size=K, dilation=dil))
    ref2 = _reference(x2, params2, kernel_size=K, dilation=dil)
    assert jnp.allclose(out2, ref2, rtol=1e-4, atol=1e-4), "mismatch (identity path)"

    print("KERNEL_OK")
</pallas_src>

<mosaic_0001>
module attributes {stable_mosaic.version = 11 : i64} {
  func.func @_temporal_block_kernel(%arg0: i32, %arg1: memref<1x4x16xf32, #tpu.memory_space<vmem>>, %arg2: memref<8x12xf32, #tpu.memory_space<vmem>>, %arg3: memref<8x1xf32, #tpu.memory_space<vmem>>, %arg4: memref<8x24xf32, #tpu.memory_space<vmem>>, %arg5: memref<8x1xf32, #tpu.memory_space<vmem>>, %arg6: memref<8x4xf32, #tpu.memory_space<vmem>>, %arg7: memref<8x1xf32, #tpu.memory_space<vmem>>, %arg8: memref<1x8x16xf32, #tpu.memory_space<vmem>>) attributes {dimension_semantics = [#tpu.dimension_semantics<parallel>], iteration_bounds = array<i64: 2>, scalar_prefetch = 0 : i64, scratch_operands = 0 : i64, tpu.core_type = #tpu.core_type<tc>, window_params = [{transform_indices = @transform_0, window_bounds = array<i64: 1, 4, 16>}, {pipeline_mode = #tpu.pipeline_mode<synchronous>, transform_indices = @transform_1, window_bounds = array<i64: 8, 12>}, {pipeline_mode = #tpu.pipeline_mode<synchronous>, transform_indices = @transform_2, window_bounds = array<i64: 8, 1>}, {pipeline_mode = #tpu.pipeline_mode<synchronous>, transform_indices = @transform_3, window_bounds = array<i64: 8, 24>}, {pipeline_mode = #tpu.pipeline_mode<synchronous>, transform_indices = @transform_4, window_bounds = array<i64: 8, 1>}, {pipeline_mode = #tpu.pipeline_mode<synchronous>, transform_indices = @transform_5, window_bounds = array<i64: 8, 4>}, {pipeline_mode = #tpu.pipeline_mode<synchronous>, transform_indices = @transform_6, window_bounds = array<i64: 8, 1>}, {transform_indices = @transform_7, window_bounds = array<i64: 1, 8, 16>}]} {
    %c0 = arith.constant 0 : index
    %c0_0 = arith.constant 0 : index
    %c0_1 = arith.constant 0 : index
    %0 = vector.load %arg1[%c0, %c0_0, %c0_1] : memref<1x4x16xf32, #tpu.memory_space<vmem>>, vector<1x4x16xf32>
    %cst = arith.constant 0.000000e+00 : f32
    %1 = vector.broadcast %cst : f32 to vector<1x4x8xf32>
    %2 = tpu.concatenate %1, %0 in 2 : vector<1x4x8xf32>, vector<1x4x16xf32> -> vector<1x4x24xf32>
    %3 = vector.extract_strided_slice %2 {offsets = [0, 0, 0], sizes = [1, 4, 20], strides = [1, 1, 1]} : vector<1x4x24xf32> to vector<1x4x20xf32>
    %4 = vector.extract_strided_slice %2 {offsets = [0, 0, 2], sizes = [1, 4, 20], strides = [1, 1, 1]} : vector<1x4x24xf32> to vector<1x4x20xf32>
    %5 = vector.extract_strided_slice %2 {offsets = [0, 0, 4], sizes = [1, 4, 20], strides = [1, 1, 1]} : vector<1x4x24xf32> to vector<1x4x20xf32>
    %6 = tpu.concatenate %3, %4, %5 in 1 : vector<1x4x20xf32>, vector<1x4x20xf32>, vector<1x4x20xf32> -> vector<1x12x20xf32>
    %c0_2 = arith.constant 0 : index
    %c0_3 = arith.constant 0 : index
    %7 = vector.load %arg2[%c0_2, %c0_3] : memref<8x12xf32, #tpu.memory_space<vmem>>, vector<8x12xf32>
    %8 = vector.shape_cast %7 : vector<8x12xf32> to vector<1x8x12xf32>
    "tpu.trace_start"() <{level = 10 : i32, message = "bok,bkl->bol"}> : () -> ()
    %cst_4 = arith.constant dense<0.000000e+00> : vector<1x8x20xf32>
    %9 = tpu.matmul %8, %6, %cst_4 {dimension_numbers = #tpu.dot_dimension_numbers<[2], [1], [1], [2], [0, 0, 0, 1, 1, 2], [0], [0]>} : vector<1x8x12xf32>, vector<1x12x20xf32>, vector<1x8x20xf32> -> vector<1x8x20xf32>
    "tpu.trace_stop"() : () -> ()
    %c0_5 = arith.constant 0 : index
    %c0_6 = arith.constant 0 : index
    %10 = vector.load %arg3[%c0_5, %c0_6] : memref<8x1xf32, #tpu.memory_space<vmem>>, vector<8x1xf32>
    %11 = vector.shape_cast %10 : vector<8x1xf32> to vector<1x8x1xf32>
    %12 = vector.broadcast %11 : vector<1x8x1xf32> to vector<1x8x20xf32>
    %13 = arith.addf %9, %12 : vector<1x8x20xf32>
    %cst_7 = arith.constant 0.000000e+00 : f32
    %14 = vector.broadcast %cst_7 : f32 to vector<1x8x20xf32>
    %15 = arith.maximumf %13, %14 : vector<1x8x20xf32>
    %16 = tpu.iota {dimensions = array<i32: 2>} : vector<1x8x20xi32>
    %c4_i32 = arith.constant 4 : i32
    %17 = vector.broadcast %c4_i32 : i32 to vector<1x8x20xi32>
    %18 = arith.cmpi sge, %16, %17 : vector<1x8x20xi32>
    %cst_8 = arith.constant 0.000000e+00 : f32
    %19 = vector.broadcast %cst_8 : f32 to vector<1x8x20xf32>
    %20 = arith.select %18, %15, %19 : vector<1x8x20xi1>, vector<1x8x20xf32>
    %21 = vector.extract_strided_slice %20 {offsets = [0, 0, 0], sizes = [1, 8, 16], strides = [1, 1, 1]} : vector<1x8x20xf32> to vector<1x8x16xf32>
    %22 = vector.extract_strided_slice %20 {offsets = [0, 0, 2], sizes = [1, 8, 16], strides = [1, 1, 1]} : vector<1x8x20xf32> to vector<1x8x16xf32>
    %23 = vector.extract_strided_slice %20 {offsets = [0, 0, 4], sizes = [1, 8, 16], strides = [1, 1, 1]} : vector<1x8x20xf32> to vector<1x8x16xf32>
    %24 = tpu.concatenate %21, %22, %23 in 1 : vector<1x8x16xf32>, vector<1x8x16xf32>, vector<1x8x16xf32> -> vector<1x24x16xf32>
    %c0_9 = arith.constant 0 : index
    %c0_10 = arith.constant 0 : index
    %25 = vector.load %arg4[%c0_9, %c0_10] : memref<8x24xf32, #tpu.memory_space<vmem>>, vector<8x24xf32>
    %26 = vector.shape_cast %25 : vector<8x24xf32> to vector<1x8x24xf32>
    "tpu.trace_start"() <{level = 10 : i32, message = "bok,bkl->bol"}> : () -> ()
    %cst_11 = arith.constant dense<0.000000e+00> : vector<1x8x16xf32>
    %27 = tpu.matmul %26, %24, %cst_11 {dimension_numbers = #tpu.dot_dimension_numbers<[2], [1], [1], [2], [0, 0, 0, 1, 1, 2], [0], [0]>} : vector<1x8x24xf32>, vector<1x24x16xf32>, vector<1x8x16xf32> -> vector<1x8x16xf32>
    "tpu.trace_stop"() : () -> ()
    %c0_12 = arith.constant 0 : index
    %c0_13 = arith.constant 0 : index
    %28 = vector.load %arg5[%c0_12, %c0_13] : memref<8x1xf32, #tpu.memory_space<vmem>>, vector<8x1xf32>
    %29 = vector.shape_cast %28 : vector<8x1xf32> to vector<1x8x1xf32>
    %30 = vector.broadcast %29 : vector<1x8x1xf32> to vector<1x8x16xf32>
    %31 = arith.addf %27, %30 : vector<1x8x16xf32>
    %cst_14 = arith.constant 0.000000e+00 : f32
    %32 = vector.broadcast %cst_14 : f32 to vector<1x8x16xf32>
    %33 = arith.maximumf %31, %32 : vector<1x8x16xf32>
    %c0_15 = arith.constant 0 : index
    %c0_16 = arith.constant 0 : index
    %34 = vector.load %arg6[%c0_15, %c0_16] : memref<8x4xf32, #tpu.memory_space<vmem>>, vector<8x4xf32>
    %35 = vector.shape_cast %34 : vector<8x4xf32> to vector<1x8x4xf32>
    "tpu.trace_start"() <{level = 10 : i32, message = "boc,bcl->bol"}> : () -> ()
    %cst_17 = arith.constant dense<0.000000e+00> : vector<1x8x16xf32>
    %36 = tpu.matmul %35, %0, %cst_17 {dimension_numbers = #tpu.dot_dimension_numbers<[2], [1], [1], [2], [0, 0, 0, 1, 1, 2], [0], [0]>} : vector<1x8x4xf32>, vector<1x4x16xf32>, vector<1x8x16xf32> -> vector<1x8x16xf32>
    "tpu.trace_stop"() : () -> ()
    %c0_18 = arith.constant 0 : index
    %c0_19 = arith.constant 0 : index
    %37 = vector.load %arg7[%c0_18, %c0_19] : memref<8x1xf32, #tpu.memory_space<vmem>>, vector<8x1xf32>
    %38 = vector.shape_cast %37 : vector<8x1xf32> to vector<1x8x1xf32>
    %39 = vector.broadcast %38 : vector<1x8x1xf32> to vector<1x8x16xf32>
    %40 = arith.addf %36, %39 : vector<1x8x16xf32>
    %41 = arith.addf %33, %40 : vector<1x8x16xf32>
    %cst_20 = arith.constant 0.000000e+00 : f32
    %42 = vector.broadcast %cst_20 : f32 to vector<1x8x16xf32>
    %43 = arith.maximumf %41, %42 : vector<1x8x16xf32>
    %c0_21 = arith.constant 0 : index
    %c0_22 = arith.constant 0 : index
    %c0_23 = arith.constant 0 : index
    %44 = vector.load %arg8[%c0_21, %c0_22, %c0_23] : memref<1x8x16xf32, #tpu.memory_space<vmem>>, vector<1x8x16xf32>
    tpu.vector_store %arg8[%c0_21, %c0_22, %c0_23], %43 {strides = array<i32>} : memref<1x8x16xf32, #tpu.memory_space<vmem>>, vector<1x8x16xf32>,
    return
  }
  func.func @transform_0(%arg0: i32) -> (i32, i32, i32) {
    %c0_i32 = arith.constant 0 : i32
    %c0_i32_0 = arith.constant 0 : i32
    %c0_i32_1 = arith.constant 0 : i32
    return %arg0, %c0_i32, %c0_i32_0 : i32, i32, i32
  }
  func.func @transform_1(%arg0: i32) -> (i32, i32) {
    %c0_i32 = arith.constant 0 : i32
    %c0_i32_0 = arith.constant 0 : i32
    %c0_i32_1 = arith.constant 0 : i32
    return %c0_i32, %c0_i32_0 : i32, i32
  }
  func.func @transform_2(%arg0: i32) -> (i32, i32) {
    %c0_i32 = arith.constant 0 : i32
    %c0_i32_0 = arith.constant 0 : i32
    %c0_i32_1 = arith.constant 0 : i32
    return %c0_i32, %c0_i32_0 : i32, i32
  }
  func.func @transform_3(%arg0: i32) -> (i32, i32) {
    %c0_i32 = arith.constant 0 : i32
    %c0_i32_0 = arith.constant 0 : i32
    %c0_i32_1 = arith.constant 0 : i32
    return %c0_i32, %c0_i32_0 : i32, i32
  }
  func.func @transform_4(%arg0: i32) -> (i32, i32) {
    %c0_i32 = arith.constant 0 : i32
    %c0_i32_0 = arith.constant 0 : i32
    %c0_i32_1 = arith.constant 0 : i32
    return %c0_i32, %c0_i32_0 : i32, i32
  }
  func.func @transform_5(%arg0: i32) -> (i32, i32) {
    %c0_i32 = arith.constant 0 : i32
    %c0_i32_0 = arith.constant 0 : i32
    %c0_i32_1 = arith.constant 0 : i32
    return %c0_i32, %c0_i32_0 : i32, i32
  }
  func.func @transform_6(%arg0: i32) -> (i32, i32) {
    %c0_i32 = arith.constant 0 : i32
    %c0_i32_0 = arith.constant 0 : i32
    %c0_i32_1 = arith.constant 0 : i32
    return %c0_i32, %c0_i32_0 : i32, i32
  }
  func.func @transform_7(%arg0: i32) -> (i32, i32, i32) {
    %c0_i32 = arith.constant 0 : i32
    %c0_i32_0 = arith.constant 0 : i32
    %c0_i32_1 = arith.constant 0 : i32
    return %arg0, %c0_i32, %c0_i32_0 : i32, i32, i32
  }
}

</mosaic_0001>

<llo_original>
// kernel: tpu_custom_call.1
$region0: #{tpu_custom_call.1}
  #allocation0 [shape = 'u32[]', space=smem, size = 0x4, offset = 0x4, fixed_abs, tag = 'smem constant byte address 0x4 - core index']
  #allocation1 [shape = 'u32[144,128]{1,0:T(1,128)}', space=vmem, size = 0x12000, scoped, tag = 'internal scratch']
  %s0 = inlined_call_operand.vmem [shape: f32[2,4,16], index: 0, kind: input, shape index: {}]
  %s1 = inlined_call_operand.vmem [shape: f32[8,12], index: 1, kind: input, shape index: {}]
  %s2 = inlined_call_operand.vmem [shape: f32[8,1], index: 2, kind: input, shape index: {}]
  %s3 = inlined_call_operand.vmem [shape: f32[8,24], index: 3, kind: input, shape index: {}]
  %s4 = inlined_call_operand.vmem [shape: f32[8,1], index: 4, kind: input, shape index: {}]
  %s5 = inlined_call_operand.vmem [shape: f32[8,4], index: 5, kind: input, shape index: {}]
  %s6 = inlined_call_operand.vmem [shape: f32[8,1], index: 6, kind: input, shape index: {}]
  %s7 = inlined_call_operand.hbm [shape: f32[2,8,16], index: 7, kind: output, shape index: {}]
  %s8 = sld [smem:[#allocation0]]
  $region61: #{tpu_custom_call.1} parent=0
    _
  %s10 = ssub.s32 1, %s8
  %s11 = scalar_select 0, %s10, %s8
  $region1: #{tpu_custom_call.1} parent=0
    #allocation2 [shape = 'u8[8192]{0}', space=vmem, size = 0x2000, scoped, tag = 'output window, operand 0']
    #allocation3 [shape = 's32[2]{0}', space=sflag, size = 0x8, scoped, tag = 'scoped memory for tpu_custom_call.1']
    %12 = vsyncpa [#allocation3], 0
    %s13 = scalar_lea.sflag [#allocation3], 1
    %14 = vsyncpa %s13, 0
    loop: start=0, step=1, limit=4
    $region2: #{tpu_custom_call.1} parent=1 // loop_pre_header
      _
    $region3: #{tpu_custom_call.1} parent=1 // loop_header
      %s16 = sphi 0, %s20
      %p17 = scmp.ge.s32.totalorder %s16, 4
      %s26 = sphi 0, %s28
      %s29 = sphi 0, %s26
      %s30 = sphi 0, %s29
      %s46 = sphi 0, %s30
      %s50 = sphi 0, %s50
      %s52 = sphi 0, %s50
      %s53 = sphi 0, %s52
      %s67 = sphi 0, %s53
      %s71 = sphi 0, %s71
      %s73 = sphi 0, %s71
      %s74 = sphi 0, %s73
      %s88 = sphi 0, %s74
      %s92 = sphi 0, %s92
      %s94 = sphi 0, %s92
      %s95 = sphi 0, %s94
      %s109 = sphi 0, %s95
      %s113 = sphi 0, %s113
      %s115 = sphi 0, %s113
      %s116 = sphi 0, %s115
      %s130 = sphi 0, %s116
      %s134 = sphi 0, %s134
      %s136 = sphi 0, %s134
      %s137 = sphi 0, %s136
      %s151 = sphi 0, %s137
      %s155 = sphi 0, %s155
      %s157 = sphi 0, %s155
      %s158 = sphi 0, %s157
      %s172 = sphi 0, %s158
      %s178 = sphi 0, %s180
      %s181 = sphi 0, %s178
      %s182 = sphi 0, %s181
      %s198 = sphi 0, %s182
    $region4: #{tpu_custom_call.1} parent=1 // loop_header_branch
      %19 = sbr.rel (%p17) target = $region8
    $region5: #{tpu_custom_call.1} parent=1 // loop_body
      %s21 = ssub.s32 %s16, 1
      %s22 = ssub.s32 %s16, 2
      %s23 = sadd.s32 %s16, 1
      %s24 = ssub.s32 %s16, %s23
      %p25 = scmp.eq.s32.totalorder %s24, 0
      %s27 = sadd.s32 %s26, 1
      %s28 = scalar_select %p25, %s26, %s27
      %p31 = pneg %p25
      %p32 = scmp.eq.s32.totalorder %s16, 1
      %p33 = por %p31, %p32
      %p34 = scmp.ne.s32.totalorder %s26, %s29
      %p35 = scmp.eq.s32.totalorder %s16, 0
      %p36 = por %p34, %p35
      %p37 = scmp.ne.s32.totalorder %s26, %s29
      %p38 = scmp.eq.s32.totalorder %s21, 1
      %p39 = por %p37, %p38
      %p40 = scmp.ne.s32.totalorder %s29, %s30
      %p41 = scmp.eq.s32.totalorder %s21, 0
      %p42 = por %p40, %p41
      %p43 = scmp.ne.s32.totalorder %s29, %s30
      %p44 = scmp.eq.s32.totalorder %s22, 1
      %p45 = por %p43, %p44
      %p47 = scmp.ne.s32.totalorder %s30, %s46
      %p48 = scmp.eq.s32.totalorder %s22, 0
      %p49 = por %p47, %p48
      %s51 = sadd.s32 %s50, 1
      %p54 = scmp.eq.s32.totalorder %s16, 1
      %p55 = scmp.ne.s32.totalorder %s50, %s52
      %p56 = scmp.eq.s32.totalorder %s16, 0
      %p57 = por %p55, %p56
      %p58 = scmp.ne.s32.totalorder %s50, %s52
      %p59 = scmp.eq.s32.totalorder %s21, 1
      %p60 = por %p58, %p59
      %p61 = scmp.ne.s32.totalorder %s52, %s53
      %p62 = scmp.eq.s32.totalorder %s21, 0
      %p63 = por %p61, %p62
      %p64 = scmp.ne.s32.totalorder %s52, %s53
      %p65 = scmp.eq.s32.totalorder %s22, 1
      %p66 = por %p64, %p65
      %p68 = scmp.ne.s32.totalorder %s53, %s67
      %p69 = scmp.eq.s32.totalorder %s22, 0
      %p70 = por %p68, %p69
      %s72 = sadd.s32 %s71, 1
      %p75 = scmp.eq.s32.totalorder %s16, 1
      %p76 = scmp.ne.s32.totalorder %s71, %s73
      %p77 = scmp.eq.s32.totalorder %s16, 0
      %p78 = por %p76, %p77
      %p79 = scmp.ne.s32.totalorder %s71, %s73
      %p80 = scmp.eq.s32.totalorder %s21, 1
      %p81 = por %p79, %p80
      %p82 = scmp.ne.s32.totalorder %s73, %s74
      %p83 = scmp.eq.s32.totalorder %s21, 0
      %p84 = por %p82, %p83
      %p85 = scmp.ne.s32.totalorder %s73, %s74
      %p86 = scmp.eq.s32.totalorder %s22, 1
      %p87 = por %p85, %p86
      %p89 = scmp.ne.s32.totalorder %s74, %s88
      %p90 = scmp.eq.s32.totalorder %s22, 0
      %p91 = por %p89, %p90
      %s93 = sadd.s32 %s92, 1
      %p96 = scmp.eq.s32.totalorder %s16, 1
      %p97 = scmp.ne.s32.totalorder %s92, %s94
      %p98 = scmp.eq.s32.totalorder %s16, 0
      %p99 = por %p97, %p98
      %p100 = scmp.ne.s32.totalorder %s92, %s94
      %p101 = scmp.eq.s32.totalorder %s21, 1
      %p102 = por %p100, %p101
      %p103 = scmp.ne.s32.totalorder %s94, %s95
      %p104 = scmp.eq.s32.totalorder %s21, 0
      %p105 = por %p103, %p104
      %p106 = scmp.ne.s32.totalorder %s94, %s95
      %p107 = scmp.eq.s32.totalorder %s22, 1
      %p108 = por %p106, %p107
      %p110 = scmp.ne.s32.totalorder %s95, %s109
      %p111 = scmp.eq.s32.totalorder %s22, 0
      %p112 = por %p110, %p111
      %s114 = sadd.s32 %s113, 1
      %p117 = scmp.eq.s32.totalorder %s16, 1
      %p118 = scmp.ne.s32.totalorder %s113, %s115
      %p119 = scmp.eq.s32.totalorder %s16, 0
      %p120 = por %p118, %p119
      %p121 = scmp.ne.s32.totalorder %s113, %s115
      %p122 = scmp.eq.s32.totalorder %s21, 1
      %p123 = por %p121, %p122
      %p124 = scmp.ne.s32.totalorder %s115, %s116
      %p125 = scmp.eq.s32.totalorder %s21, 0
      %p126 = por %p124, %p125
      %p127 = scmp.ne.s32.totalorder %s115, %s116
      %p128 = scmp.eq.s32.totalorder %s22, 1
      %p129 = por %p127, %p128
      %p131 = scmp.ne.s32.totalorder %s116, %s130
      %p132 = scmp.eq.s32.totalorder %s22, 0
      %p133 = por %p131, %p132
      %s135 = sadd.s32 %s134, 1
      %p138 = scmp.eq.s32.totalorder %s16, 1
      %p139 = scmp.ne.s32.totalorder %s134, %s136
      %p140 = scmp.eq.s32.totalorder %s16, 0
      %p141 = por %p139, %p140
      %p142 = scmp.ne.s32.totalorder %s134, %s136
      %p143 = scmp.eq.s32.totalorder %s21, 1
      %p144 = por %p142, %p143
      %p145 = scmp.ne.s32.totalorder %s136, %s137
      %p146 = scmp.eq.s32.totalorder %s21, 0
      %p147 = por %p145, %p146
      %p148 = scmp.ne.s32.totalorder %s136, %s137
      %p149 = scmp.eq.s32.totalorder %s22, 1
      %p150 = por %p148, %p149
      %p152 = scmp.ne.s32.totalorder %s137, %s151
      %p153 = scmp.eq.s32.totalorder %s22, 0
      %p154 = por %p152, %p153
      %s156 = sadd.s32 %s155, 1
      %p159 = scmp.eq.s32.totalorder %s16, 1
      %p160 = scmp.ne.s32.totalorder %s155, %s157
      %p161 = scmp.eq.s32.totalorder %s16, 0
      %p162 = por %p160, %p161
      %p163 = scmp.ne.s32.totalorder %s155, %s157
      %p164 = scmp.eq.s32.totalorder %s21, 1
      %p165 = por %p163, %p164
      %p166 = scmp.ne.s32.totalorder %s157, %s158
      %p167 = scmp.eq.s32.totalorder %s21, 0
      %p168 = por %p166, %p167
      %p169 = scmp.ne.s32.totalorder %s157, %s158
      %p170 = scmp.eq.s32.totalorder %s22, 1
      %p171 = por %p169, %p170
      %p173 = scmp.ne.s32.totalorder %s158, %s172
      %p174 = scmp.eq.s32.totalorder %s22, 0
      %p175 = por %p173, %p174
      %s176 = ssub.s32 %s16, %s23
      %p177 = scmp.eq.s32.totalorder %s176, 0
      %s179 = sadd.s32 %s178, 1
      %s180 = scalar_select %p177, %s178, %s179
      %p183 = pneg %p177
      %p184 = scmp.eq.s32.totalorder %s16, 1
      %p185 = por %p183, %p184
      %p186 = scmp.ne.s32.totalorder %s178, %s181
      %p187 = scmp.eq.s32.totalorder %s16, 0
      %p188 = por %p186, %p187
      %p189 = scmp.ne.s32.totalorder %s178, %s181
      %p190 = scmp.eq.s32.totalorder %s21, 1
      %p191 = por %p189, %p190
      %p192 = scmp.ne.s32.totalorder %s181, %s182
      %p193 = scmp.eq.s32.totalorder %s21, 0
      %p194 = por %p192, %p193
      %p195 = scmp.ne.s32.totalorder %s181, %s182
      %p196 = scmp.eq.s32.totalorder %s22, 1
      %p197 = por %p195, %p196
      %p199 = scmp.ne.s32.totalorder %s182, %s198
      %p200 = scmp.eq.s32.totalorder %s22, 0
      %p201 = por %p199, %p200
      %p202 = scmp.le.s32.totalorder 1, %s16
      %p203 = scmp.lt.s32.totalorder %s16, 3
      %p204 = pnand %p202, %p203
      %p205 = pneg %p204
      // Predicated region
      $region9: #{tpu_custom_call.1} parent=5 // pred_check
        _
      $region10: #{tpu_custom_call.1} parent=5 // pred_check_branch
        %207 = sbr.rel (%p204) target = $region12
      $region11: #{tpu_custom_call.1} parent=5 // pred_region
        %s208 = ssub.s32 %s16, 1
        // Predicated region
        $region13: #{tpu_custom_call.1} parent=11 // pred_check
          %p209 = pneg %p63
        $region14: #{tpu_custom_call.1} parent=11 // pred_check_branch
          %211 = sbr.rel (%p209) target = $region16
        $region15: #{tpu_custom_call.1} parent=11 // pred_region
          _
        $region16: #{tpu_custom_call.1} parent=11 // pred_fallthru
          _
        // Predicated region
        $region17: #{tpu_custom_call.1} parent=11 // pred_check
          %p212 = pneg %p84
        $region18: #{tpu_custom_call.1} parent=11 // pred_check_branch
          %214 = sbr.rel (%p212) target = $region20
        $region19: #{tpu_custom_call.1} parent=11 // pred_region
          _
        $region20: #{tpu_custom_call.1} parent=11 // pred_fallthru
          _
        // Predicated region
        $region21: #{tpu_custom_call.1} parent=11 // pred_check
          %p215 = pneg %p105
        $region22: #{tpu_custom_call.1} parent=11 // pred_check_branch
          %217 = sbr.rel (%p215) target = $region24
        $region23: #{tpu_custom_call.1} parent=11 // pred_region
          _
        $region24: #{tpu_custom_call.1} parent=11 // pred_fallthru
          _
        // Predicated region
        $region25: #{tpu_custom_call.1} parent=11 // pred_check
          %p218 = pneg %p126
        $region26: #{tpu_custom_call.1} parent=11 // pred_check_branch
          %220 = sbr.rel (%p218) target = $region28
        $region27: #{tpu_custom_call.1} parent=11 // pred_region
          _
        $region28: #{tpu_custom_call.1} parent=11 // pred_fallthru
          _
        // Predicated region
        $region29: #{tpu_custom_call.1} parent=11 // pred_check
          %p221 = pneg %p147
        $region30: #{tpu_custom_call.1} parent=11 // pred_check_branch
          %223 = sbr.rel (%p221) target = $region32
        $region31: #{tpu_custom_call.1} parent=11 // pred_region
          _
        $region32: #{tpu_custom_call.1} parent=11 // pred_fallthru
          _
        // Predicated region
        $region33: #{tpu_custom_call.1} parent=11 // pred_check
          %p224 = pneg %p168
        $region34: #{tpu_custom_call.1} parent=11 // pred_check_branch
          %226 = sbr.rel (%p224) target = $region36
        $region35: #{tpu_custom_call.1} parent=11 // pred_region
          _
        $region36: #{tpu_custom_call.1} parent=11 // pred_fallthru
          _
      $region12: #{tpu_custom_call.1} parent=5 // pred_fallthru
        _
      %p227 = scmp.lt.s32.totalorder %s16, 2
      // Predicated region
      $region37: #{tpu_custom_call.1} parent=5 // pred_check
        %p228 = pneg %p227
      $region38: #{tpu_custom_call.1} parent=5 // pred_check_branch
        %230 = sbr.rel (%p228) target = $region40
      $region39: #{tpu_custom_call.1} parent=5 // pred_region
        // Predicated region
        $region41: #{tpu_custom_call.1} parent=39 // pred_check
          %p231 = pneg %p36
        $region42: #{tpu_custom_call.1} parent=39 // pred_check_branch
          %233 = sbr.rel (%p231) target = $region44
        $region43: #{tpu_custom_call.1} parent=39 // pred_region
          %p234 = scmp.lt.s32.totalorder %s16, 1
          %s235 = scalar_select %p234, %s16, 1
          %s236 = smul.addr %s235, 4
          %s237 = scalar_lea.vmem %s0, %s236
        $region44: #{tpu_custom_call.1} parent=39 // pred_fallthru
          _
      $region40: #{tpu_custom_call.1} parent=5 // pred_fallthru
        _
      %p238 = scmp.le.s32.totalorder 1, %s16
      %p239 = scmp.lt.s32.totalorder %s16, 3
      %p240 = pnand %p238, %p239
      %p241 = pneg %p240
      // Predicated region
      $region45: #{tpu_custom_call.1} parent=5 // pred_check
        _
      $region46: #{tpu_custom_call.1} parent=5 // pred_check_branch
        %243 = sbr.rel (%p240) target = $region48
      $region47: #{tpu_custom_call.1} parent=5 // pred_region
        %s244 = ssub.s32 %s16, 1
        %p245 = scmp.lt.s32.totalorder %s21, 1
        %s246 = scalar_select %p245, %s21, 1
        %s247 = smul.addr %s246, 4
        %s248 = scalar_lea.vmem %s0, %s247
        %p249 = pneg %p42
        %p250 = pneg %p39
        %p251 = pneg %p63
        %p252 = pneg %p60
        %p253 = pneg %p84
        %p254 = pneg %p81
        %p255 = pneg %p105
        %p256 = pneg %p102
        %p257 = pneg %p126
        %p258 = pneg %p123
        %p259 = pneg %p147
        %p260 = pneg %p144
        %p261 = pneg %p168
        %p262 = pneg %p165
        %p263 = pneg %p194
        %p264 = pneg %p191
        %s265 = sand.u32 %s181, 1
        %s266 = scalar_lea.sflag [#allocation3], %s265
        %s267 = sand.u32 %s181, 1
        %s268 = smul.addr %s267, 8
        %s269 = scalar_lea.vmem [#allocation2], %s268
        %p270 = scmp.lt.s32.totalorder %s21, 1
        %s271 = scalar_select %p270, %s21, 1
        %s272 = smul.addr %s271, 4
        %s273 = scalar_lea.vmem %s0, %s272
        %v274 = vld [vmem:[%s273] sm:$0xf]
        %276 = vrot.lane.b32.xlu0 %v274, 8
        %v277 = vpop.permute.xlu0 %276
        %vm279 = vcmask 64512
        %v280 = vsel %vm279, 0.0, %v277
        %v282 = vrot.slane %v280, 4
        %283 = vrot.lane.b32.xlu0 %v282, 126
        %v284 = vpop.permute.xlu0 %283
        %286 = vrot.lane.b32.xlu0 %v280, 124
        %v287 = vpop.permute.xlu0 %286
        %vm288 = vcmask 1043456
        %v289 = vsel %vm288, %v280, %v284
        %v290 = vld [vmem:[%s1] sm:$0xff]
        %v291 = vld [vmem:[%s2] sm:$0xff]
        %293 = vset.pattern.permute.xlu0 0
        %294 = vperm.xlu0 %293, %v291
        %v295 = vpop.permute.xlu0 %294
        %vm297 = vcmask 97280
        %v299 = vsel %vm297, %v290, 0
        %v301 = vsel %vm288, %v287, 0
        %303 = vmatprep.subr.mxu0 0.0
        %304 = vmatpush1.msra.mxu0 0.0
        %305 = vmatprep.subr.mxu0 0.0
        %306 = vmatpush1.msra.mxu0 0.0
        %307 = vmatprep.subr.mxu0 0.0
        %308 = vmatpush1.msra.mxu0 0.0
        %309 = vmatprep.subr.mxu0 0.0
        %310 = vmatpush1.msra.mxu0 0.0
        %311 = vmatprep.subr.mxu0 0.0
        %312 = vmatpush1.msra.mxu0 0.0
        %313 = vmatprep.subr.mxu0 0.0
        %314 = vmatpush1.msra.mxu0 0.0
        %315 = vmatprep.subr.mxu0 0.0
        %316 = vmatpush1.msra.mxu0 0.0
        %317 = vmatprep.subr.mxu0 0.0
        %318 = vmatpush1.msra.mxu0 0.0
        %319 = vmatprep.subr.mxu0 0.0
        %320 = vmatpush1.msra.mxu0 0.0
        %321 = vmatprep.subr.mxu0 0.0
        %322 = vmatpush1.msra.mxu0 0.0
        %323 = vmatprep.subr.mxu0 0.0
        %324 = vmatpush1.msra.mxu0 0.0
        %325 = vmatprep.subr.mxu0 0.0
        %326 = vmatpush1.msra.mxu0 0.0
        %327 = vmatprep.subr.mxu0 0.0
        %328 = vmatpush1.msra.mxu0 0.0
        %329 = vmatprep.subr.mxu0 0.0
        %330 = vmatpush1.msra.mxu0 0.0
        %331 = vmatprep.subr.mxu0 0.0
        %332 = vmatpush1.msra.mxu0 %v301
        %333 = vmatprep.subr.mxu0 0.0
        %334 = vmatpush1.msra.mxu0 %v289
        %335 = vmatprep.subr.mxu0 0.0
        %336 = vmatpush2.msra.mxu0 0.0
        %337 = vmatprep.subr.mxu0 0.0
        %338 = vmatpush2.msra.mxu0 0.0
        %339 = vmatprep.subr.mxu0 0.0
        %340 = vmatpush2.msra.mxu0 0.0
        %341 = vmatprep.subr.mxu0 0.0
        %342 = vmatpush2.msra.mxu0 0.0
        %343 = vmatprep.subr.mxu0 0.0
        %344 = vmatpush2.msra.mxu0 0.0
        %345 = vmatprep.subr.mxu0 0.0
        %346 = vmatpush2.msra.mxu0 0.0
        %347 = vmatprep.subr.mxu0 0.0
        %348 = vmatpush2.msra.mxu0 0.0
        %349 = vmatprep.subr.mxu0 0.0
        %350 = vmatpush2.msra.mxu0 0.0
        %351 = vmatprep.subr.mxu0 0.0
        %352 = vmatpush2.msra.mxu0 0.0
        %353 = vmatprep.subr.mxu0 0.0
        %354 = vmatpush2.msra.mxu0 0.0
        %355 = vmatprep.subr.mxu0 0.0
        %356 = vmatpush2.msra.mxu0 0.0
        %357 = vmatprep.subr.mxu0 0.0
        %358 = vmatpush2.msra.mxu0 0.0
        %359 = vmatprep.subr.mxu0 0.0
        %360 = vmatpush2.msra.mxu0 0.0
        %361 = vmatprep.subr.mxu0 0.0
        %362 = vmatpush2.msra.mxu0 0.0
        %363 = vmatprep.subr.mxu0 0.0
        %364 = vmatpush2.msra.mxu0 0.0
        %365 = vmatprep.subr.mxu0 0.0
        %366 = vmatpush2.msra.mxu0 0.0
        %367 = vmatprep.mubr.f32.mxu0 0.0
        %368 = vmatmul.mubr.f32.gmra.mxu0 %v299
        %v369 = vpop.f32.mrf.mxu0
        %v370 = vadd.f32 %v295, %v369
        %v371 = vpop.f32.mrf.mxu0
        %372 = vdwg.mxu0
        %v373 = vmax.f32 %v370, 0.0
        %v374 = vlaneseq
        %v375 = vand.u32 %v374, 127
        %vm376 = vcmp.ge.s32.totalorder %v375, 4
        %v377 = vsel %vm376, %v373, 0.0
        %379 = vrot.lane.b32.xlu0 %v377, 126
        %v380 = vpop.permute.xlu0 %379
        %382 = vrot.lane.b32.xlu0 %v377, 124
        %v383 = vpop.permute.xlu0 %382
        %v385 = vld [vmem:[%s3] sm:$0xff]
        %v386 = vld [vmem:[%s4] sm:$0xff]
        %388 = vset.pattern.permute.xlu0 0
        %389 = vperm.xlu0 %388, %v386
        %v390 = vpop.permute.xlu0 %389
        %vm392 = vcmask 195584
        %v394 = vsel %vm392, %v385, 0
        %396 = vmatprep.subr.mxu0 0.0
        %397 = vmatpush1.msra.mxu0 0.0
        %398 = vmatprep.subr.mxu0 0.0
        %399 = vmatpush1.msra.mxu0 0.0
        %400 = vmatprep.subr.mxu0 0.0
        %401 = vmatpush1.msra.mxu0 0.0
        %402 = vmatprep.subr.mxu0 0.0
        %403 = vmatpush1.msra.mxu0 0.0
        %404 = vmatprep.subr.mxu0 0.0
        %405 = vmatpush1.msra.mxu0 0.0
        %406 = vmatprep.subr.mxu0 0.0
        %407 = vmatpush1.msra.mxu0 0.0
        %408 = vmatprep.subr.mxu0 0.0
        %409 = vmatpush1.msra.mxu0 0.0
        %410 = vmatprep.subr.mxu0 0.0
        %411 = vmatpush1.msra.mxu0 0.0
        %412 = vmatprep.subr.mxu0 0.0
        %413 = vmatpush1.msra.mxu0 0.0
        %414 = vmatprep.subr.mxu0 0.0
        %415 = vmatpush1.msra.mxu0 0.0
        %416 = vmatprep.subr.mxu0 0.0
        %417 = vmatpush1.msra.mxu0 0.0
        %418 = vmatprep.subr.mxu0 0.0
        %419 = vmatpush1.msra.mxu0 0.0
        %420 = vmatprep.subr.mxu0 0.0
        %421 = vmatpush1.msra.mxu0 0.0
        %422 = vmatprep.subr.mxu0 0.0
        %423 = vmatpush1.msra.mxu0 %v383
        %424 = vmatprep.subr.mxu0 0.0
        %425 = vmatpush1.msra.mxu0 %v380
        %426 = vmatprep.subr.mxu0 0.0
        %427 = vmatpush1.msra.mxu0 %v377
        %428 = vmatprep.subr.mxu0 0.0
        %429 = vmatpush2.msra.mxu0 0.0
        %430 = vmatprep.subr.mxu0 0.0
        %431 = vmatpush2.msra.mxu0 0.0
        %432 = vmatprep.subr.mxu0 0.0
        %433 = vmatpush2.msra.mxu0 0.0
        %434 = vmatprep.subr.mxu0 0.0
        %435 = vmatpush2.msra.mxu0 0.0
        %436 = vmatprep.subr.mxu0 0.0
        %437 = vmatpush2.msra.mxu0 0.0
        %438 = vmatprep.subr.mxu0 0.0
        %439 = vmatpush2.msra.mxu0 0.0
        %440 = vmatprep.subr.mxu0 0.0
        %441 = vmatpush2.msra.mxu0 0.0
        %442 = vmatprep.subr.mxu0 0.0
        %443 = vmatpush2.msra.mxu0 0.0
        %444 = vmatprep.subr.mxu0 0.0
        %445 = vmatpush2.msra.mxu0 0.0
        %446 = vmatprep.subr.mxu0 0.0
        %447 = vmatpush2.msra.mxu0 0.0
        %448 = vmatprep.subr.mxu0 0.0
        %449 = vmatpush2.msra.mxu0 0.0
        %450 = vmatprep.subr.mxu0 0.0
        %451 = vmatpush2.msra.mxu0 0.0
        %452 = vmatprep.subr.mxu0 0.0
        %453 = vmatpush2.msra.mxu0 0.0
        %454 = vmatprep.subr.mxu0 0.0
        %455 = vmatpush2.msra.mxu0 0.0
        %456 = vmatprep.subr.mxu0 0.0
        %457 = vmatpush2.msra.mxu0 0.0
        %458 = vmatprep.subr.mxu0 0.0
        %459 = vmatpush2.msra.mxu0 0.0
        %460 = vmatprep.mubr.f32.mxu0 0.0
        %461 = vmatmul.mubr.f32.gmra.mxu0 %v394
        %v462 = vpop.f32.mrf.mxu0
        %v463 = vadd.f32 %v390, %v462
        %v464 = vpop.f32.mrf.mxu0
        %465 = vdwg.mxu0
        %v466 = vmax.f32 %v463, 0.0
        %v467 = vld [vmem:[%s5] sm:$0xff]
        %v468 = vld [vmem:[%s6] sm:$0xff]
        %470 = vset.pattern.permute.xlu0 0
        %471 = vperm.xlu0 %470, %v468
        %v472 = vpop.permute.xlu0 %471
        %vm474 = vcmask 31744
        %v476 = vsel %vm474, %v467, 0
        %v478 = vsel %vm288, %v274, 0
        %480 = vmatprep.subr.mxu0 0.0
        %481 = vmatpush1.msra.mxu0 0.0
        %482 = vmatprep.subr.mxu0 0.0
        %483 = vmatpush1.msra.mxu0 0.0
        %484 = vmatprep.subr.mxu0 0.0
        %485 = vmatpush1.msra.mxu0 0.0
        %486 = vmatprep.subr.mxu0 0.0
        %487 = vmatpush1.msra.mxu0 0.0
        %488 = vmatprep.subr.mxu0 0.0
        %489 = vmatpush1.msra.mxu0 0.0
        %490 = vmatprep.subr.mxu0 0.0
        %491 = vmatpush1.msra.mxu0 0.0
        %492 = vmatprep.subr.mxu0 0.0
        %493 = vmatpush1.msra.mxu0 0.0
        %494 = vmatprep.subr.mxu0 0.0
        %495 = vmatpush1.msra.mxu0 0.0
        %496 = vmatprep.subr.mxu0 0.0
        %497 = vmatpush1.msra.mxu0 0.0
        %498 = vmatprep.subr.mxu0 0.0
        %499 = vmatpush1.msra.mxu0 0.0
        %500 = vmatprep.subr.mxu0 0.0
        %501 = vmatpush1.msra.mxu0 0.0
        %502 = vmatprep.subr.mxu0 0.0
        %503 = vmatpush1.msra.mxu0 0.0
        %504 = vmatprep.subr.mxu0 0.0
        %505 = vmatpush1.msra.mxu0 0.0
        %506 = vmatprep.subr.mxu0 0.0
        %507 = vmatpush1.msra.mxu0 0.0
        %508 = vmatprep.subr.mxu0 0.0
        %509 = vmatpush1.msra.mxu0 0.0
        %510 = vmatprep.subr.mxu0 0.0
        %511 = vmatpush1.msra.mxu0 %v478
        %512 = vmatprep.subr.mxu0 0.0
        %513 = vmatpush2.msra.mxu0 0.0
        %514 = vmatprep.subr.mxu0 0.0
        %515 = vmatpush2.msra.mxu0 0.0
        %516 = vmatprep.subr.mxu0 0.0
        %517 = vmatpush2.msra.mxu0 0.0
        %518 = vmatprep.subr.mxu0 0.0
        %519 = vmatpush2.msra.mxu0 0.0
        %520 = vmatprep.subr.mxu0 0.0
        %521 = vmatpush2.msra.mxu0 0.0
        %522 = vmatprep.subr.mxu0 0.0
        %523 = vmatpush2.msra.mxu0 0.0
        %524 = vmatprep.subr.mxu0 0.0
        %525 = vmatpush2.msra.mxu0 0.0
        %526 = vmatprep.subr.mxu0 0.0
        %527 = vmatpush2.msra.mxu0 0.0
        %528 = vmatprep.subr.mxu0 0.0
        %529 = vmatpush2.msra.mxu0 0.0
        %530 = vmatprep.subr.mxu0 0.0
        %531 = vmatpush2.msra.mxu0 0.0
        %532 = vmatprep.subr.mxu0 0.0
        %533 = vmatpush2.msra.mxu0 0.0
        %534 = vmatprep.subr.mxu0 0.0
        %535 = vmatpush2.msra.mxu0 0.0
        %536 = vmatprep.subr.mxu0 0.0
        %537 = vmatpush2.msra.mxu0 0.0
        %538 = vmatprep.subr.mxu0 0.0
        %539 = vmatpush2.msra.mxu0 0.0
        %540 = vmatprep.subr.mxu0 0.0
        %541 = vmatpush2.msra.mxu0 0.0
        %542 = vmatprep.subr.mxu0 0.0
        %543 = vmatpush2.msra.mxu0 0.0
        %544 = vmatprep.mubr.f32.mxu0 0.0
        %545 = vmatmul.mubr.f32.gmra.mxu0 %v476
        %v546 = vpop.f32.mrf.mxu0
        %v547 = vadd.f32 %v472, %v546
        %v548 = vpop.f32.mrf.mxu0
        %549 = vdwg.mxu0
        %v550 = vadd.f32 %v466, %v547
        %v551 = vmax.f32 %v550, 0.0
        %vm552 = vcmask 130048
        %553 = vst.msk [vmem:[%s269] sm:$0xff] %vm552, %v551
        %s554 = sand.u32 %s181, 1
        %s555 = scalar_lea.sflag [#allocation3], %s554
        %s556 = sand.u32 %s181, 1
        %s557 = smul.addr %s556, 8
        %s558 = scalar_lea.vmem [#allocation2], %s557
        // Predicated region
        $region49: #{tpu_custom_call.1} parent=47 // pred_check
          %p559 = pneg %p191
        $region50: #{tpu_custom_call.1} parent=47 // pred_check_branch
          %561 = sbr.rel (%p559) target = $region52
        $region51: #{tpu_custom_call.1} parent=47 // pred_region
          %s563 = ssub.s32 128, 128
          %564 = vsyncadd %s555, %s563
          %s565 = smul.addr %s21, 128
          %s566 = scalar_lea.hbm %s7, %s565
          %s568 = sshll.u32 %s558, 4
          %s569 = int_to_ptr.vmem [resolvable:$true] %s568
          %571 = dma.vmem_to_hbm [thread:$0]  %s569, 128, %s566, %s555
        $region52: #{tpu_custom_call.1} parent=47 // pred_fallthru
          _
      $region48: #{tpu_custom_call.1} parent=5 // pred_fallthru
        _
      %p572 = scmp.le.s32.totalorder 2, %s16
      // Predicated region
      $region53: #{tpu_custom_call.1} parent=5 // pred_check
        %p573 = pneg %p572
      $region54: #{tpu_custom_call.1} parent=5 // pred_check_branch
        %575 = sbr.rel (%p573) target = $region56
      $region55: #{tpu_custom_call.1} parent=5 // pred_region
        %s576 = ssub.s32 %s16, 2
        // Predicated region
        $region57: #{tpu_custom_call.1} parent=55 // pred_check
          %p577 = pneg %p197
        $region58: #{tpu_custom_call.1} parent=55 // pred_check_branch
          %579 = sbr.rel (%p577) target = $region60
        $region59: #{tpu_custom_call.1} parent=55 // pred_region
          %s580 = sand.u32 %s182, 1
          %s581 = scalar_lea.sflag [#allocation3], %s580
          %s582 = sand.u32 %s182, 1
          %s583 = smul.addr %s582, 8
          %s584 = scalar_lea.vmem [#allocation2], %s583
          %585 = dma.done %s581, 128
        $region60: #{tpu_custom_call.1} parent=55 // pred_fallthru
          _
      $region56: #{tpu_custom_call.1} parent=5 // pred_fallthru
        _
    $region6: #{tpu_custom_call.1} parent=1 // loop_footer
      %s20 = sadd.s32 1, %s16
    $region7: #{tpu_custom_call.1} parent=1 // loop_footer_branch
      %15 = sbr.rel target = $region3
    $region8: #{tpu_custom_call.1} parent=1 // loop_exit
      _
    %586 = vsyncpa [#allocation3], 1
    %s587 = scalar_lea.sflag [#allocation3], 1
    %588 = vsyncpa %s587, 1

</llo_original>
